<compile_context>
chip_gen: v6e
topology: v6e:2x2x1
jax: 0.10.0
libtpu: 0.0.40
codegen_flags: <defaults>
</compile_context>

<pallas_src>
import jax
import jax.numpy as jnp
from jax.experimental import pallas as pl
from jax.experimental.pallas import tpu as pltpu


def _attention_kernel(x_ref, w_ref, o_ref):
    # x_ref: (TB, T, H) VMEM block of lstm_output.
    # w_ref: (1, H) VMEM, nn.Linear(hidden, 1) weight kept lane-dense & resident.
    # o_ref: (TB, H) VMEM output block (lane-dense, unmasked stores).
    x = x_ref[...]                                           # (TB, T, H)
    w = w_ref[...]                                           # (1, H)

    # Linear(H, 1) scores: VPU multiply + XLU lane reduce, f32 accumulation.
    scores = jnp.sum((x * w[None]).astype(jnp.float32), axis=-1)   # (TB, T)
    # NOTE: the Linear bias is omitted on purpose -- a constant shift is
    # exactly cancelled by the softmax max-subtraction below.

    # Softmax over the sequence axis (T on lanes).
    m = jnp.max(scores, axis=-1, keepdims=True)              # (TB, 1)
    e = jnp.exp(scores - m)                                  # (TB, T) (EUP)
    denom = jnp.sum(e, axis=-1, keepdims=True)               # (TB, 1)

    # Context: batched (1, T) @ (T, H) on the MXU with f32 accumulation.
    ctx = jnp.einsum(
        "bqt,bth->bqh",
        e.astype(x.dtype)[:, None, :], x,
        preferred_element_type=jnp.float32,
        precision=jax.lax.Precision.HIGHEST,
    )[:, 0, :]                                               # (TB, H)

    # Exact reciprocal of the (TB, 1) denominator, folded into the (TB, H)
    # context (exactness is free at this size and restores ~1e-5 agreement).
    ctx = ctx * pl.reciprocal(denom, approx=False)
    o_ref[...] = ctx.astype(o_ref.dtype)


def _vmem_capacity_bytes():
    try:
        return pltpu.get_tpu_info().vmem_capacity_bytes
    except Exception:
        return 64 * 1024 * 1024  # assume the smallest (v7x-class) VMEM if unknown


def _pick_block_b(B, T, H, itemsize, tile_budget):
    """Pick TB (batch rows per grid step).

    Preferences, in order:
      * TB divides B and is a multiple of 8 (sublane-aligned blocks), or TB == B.
      * 2x(x tile) + 2x(out tile) + f32 in-kernel temporaries fit `tile_budget`.
      * >= 4 grid steps with an even step count (pipeline overlap + both v7x TCs),
        then >= 2 even steps, then >= 2 steps, then the largest fitting tile.
    """
    cands = [d for d in range(8, B, 8) if B % d == 0]
    cands.append(B)

    def footprint(tb):
        x_tile = tb * T * H * itemsize
        out_tile = tb * H * itemsize
        temps = tb * T * H * 4 + 3 * tb * T * 4 + tb * H * 4  # f32 temporaries
        return 2 * x_tile + 2 * out_tile + temps

    fitting = [tb for tb in cands if footprint(tb) <= tile_budget]
    if not fitting:
        # NOTE: if even the smallest block is over budget (very large T*H), the
        # right structure is a second "arbitrary" T grid axis with online-softmax
        # accumulators in VMEM scratch; unnecessary at these sizes.
        return min(cands)
    for pred in (
        lambda tb: (B // tb) >= 4 and (B // tb) % 2 == 0,
        lambda tb: (B // tb) >= 2 and (B // tb) % 2 == 0,
        lambda tb: (B // tb) >= 2,
        lambda tb: True,
    ):
        ok = [tb for tb in fitting if pred(tb)]
        if ok:
            return max(ok)


def attention_layer(lstm_output, w, b=None, block_b=None):
    """lstm_output: (B, T, H); w: (1, H) nn.Linear weight; b: (1, 1) bias.

    The bias is accepted for API parity but never read: a constant bias is
    exactly cancelled by the softmax over T.  Returns (B, H).
    """
    del b  # cancelled by the softmax shift
    B, T, H = lstm_output.shape
    itemsize = jnp.dtype(lstm_output.dtype).itemsize

    # Generation-aware VMEM sizing: >=25% headroom below physical capacity and
    # never above 48 MiB (v7x has 64 MiB per TC); tiles use ~70% of the limit.
    vmem_cap = _vmem_capacity_bytes()
    vmem_limit = min(48 * 1024 * 1024, int(0.75 * vmem_cap))
    tile_budget = int(0.70 * vmem_limit)

    tb = block_b if block_b is not None else _pick_block_b(B, T, H, itemsize, tile_budget)
    assert B % tb == 0, "block_b must divide the batch size"

    cost = pl.CostEstimate(
        flops=4 * B * T * H,                 # scores + context MACs
        transcendentals=B * T,               # exp per (b, t)
        bytes_accessed=itemsize * (B * T * H + B * H + H),
    )

    # NOTE: if xprof shows exposed per-step DMA on v6e after enlarging tb, the
    # x BlockSpec is the place to sweep pipeline_mode=pl.Buffered(3).
    return pl.pallas_call(
        _attention_kernel,
        out_shape=jax.ShapeDtypeStruct((B, H), lstm_output.dtype),
        grid_spec=pltpu.PrefetchScalarGridSpec(
            num_scalar_prefetch=0,
            grid=(B // tb,),
            in_specs=[
                pl.BlockSpec((tb, T, H), lambda i: (i, 0, 0)),   # TB rows / step
                pl.BlockSpec((1, H), lambda i: (0, 0)),          # resident weight
            ],
            out_specs=pl.BlockSpec((tb, H), lambda i: (i, 0)),   # lane-dense stores
        ),
        compiler_params=pltpu.CompilerParams(
            dimension_semantics=("parallel",),
            vmem_limit_bytes=vmem_limit,
        ),
        cost_estimate=cost,
    )(lstm_output, w)


def reference_attention(lstm_output, w, b):
    # Pure-JAX reference mirroring the PyTorch module (highest-precision
    # matmuls so it is a true f32 oracle on TPU hardware as well).
    scores = jnp.einsum("bth,oh->bto", lstm_output, w,
                        precision=jax.lax.Precision.HIGHEST)[..., 0] + b[0, 0]
    attn = jax.nn.softmax(scores, axis=1)                                  # (B, T)
    return jnp.einsum("bt,bth->bh", attn, lstm_output,
                      precision=jax.lax.Precision.HIGHEST)                 # (B, H)


if __name__ == "__main__":
    key = jax.random.PRNGKey(0)
    B, T, H = 2, 8, 32

    k_x, k_w, k_b = jax.random.split(key, 3)
    lstm_output = jax.random.normal(k_x, (B, T, H), dtype=jnp.float32)
    # Deterministic "Linear(hidden_size, 1)" params in nn.Linear layout.
    bound = 1.0 / (H ** 0.5)
    w = jax.random.uniform(k_w, (1, H), minval=-bound, maxval=bound, dtype=jnp.float32)
    b = jax.random.uniform(k_b, (1, 1), minval=-bound, maxval=bound, dtype=jnp.float32)

    out = attention_layer(lstm_output, w, b)
    out = jax.block_until_ready(out)

    ref = reference_attention(lstm_output, w, b)
    assert out.shape == (B, H)
    assert jnp.allclose(out, ref, atol=2e-5, rtol=2e-5), "mismatch vs reference"

    print("KERNEL_OK")
</pallas_src>

<mosaic_0001>
module attributes {stable_mosaic.version = 11 : i64} {
  func.func @_attention_kernel(%arg0: i32, %arg1: memref<2x8x32xf32, #tpu.memory_space<vmem>>, %arg2: memref<1x32xf32, #tpu.memory_space<vmem>>, %arg3: memref<2x32xf32, #tpu.memory_space<vmem>>) attributes {dimension_semantics = [#tpu.dimension_semantics<parallel>], iteration_bounds = array<i64: 1>, scalar_prefetch = 0 : i64, scratch_operands = 0 : i64, tpu.core_type = #tpu.core_type<tc>, window_params = [{transform_indices = @transform_0, window_bounds = array<i64: 2, 8, 32>}, {pipeline_mode = #tpu.pipeline_mode<synchronous>, transform_indices = @transform_1, window_bounds = array<i64: 1, 32>}, {transform_indices = @transform_2, window_bounds = array<i64: 2, 32>}]} {
    %c0 = arith.constant 0 : index
    %c0_0 = arith.constant 0 : index
    %c0_1 = arith.constant 0 : index
    %0 = vector.load %arg1[%c0, %c0_0, %c0_1] : memref<2x8x32xf32, #tpu.memory_space<vmem>>, vector<2x8x32xf32>
    %c0_2 = arith.constant 0 : index
    %c0_3 = arith.constant 0 : index
    %1 = vector.load %arg2[%c0_2, %c0_3] : memref<1x32xf32, #tpu.memory_space<vmem>>, vector<1x32xf32>
    %2 = vector.shape_cast %1 : vector<1x32xf32> to vector<1x1x32xf32>
    %3 = vector.broadcast %2 : vector<1x1x32xf32> to vector<2x8x32xf32>
    %4 = arith.mulf %0, %3 : vector<2x8x32xf32>
    %cst = arith.constant dense<0.000000e+00> : vector<2x8xf32>
    %5 = vector.multi_reduction <add>, %4, %cst [2] : vector<2x8x32xf32> to vector<2x8xf32>
    %cst_4 = arith.constant dense<0xFF800000> : vector<2xf32>
    %6 = vector.multi_reduction <maximumf>, %5, %cst_4 [1] : vector<2x8xf32> to vector<2xf32>
    %7 = vector.shape_cast %6 : vector<2xf32> to vector<2x1xf32>
    %8 = vector.broadcast %7 : vector<2x1xf32> to vector<2x8xf32>
    %9 = arith.subf %5, %8 : vector<2x8xf32>
    %10 = math.exp %9 : vector<2x8xf32>
    %cst_5 = arith.constant dense<0.000000e+00> : vector<2xf32>
    %11 = vector.multi_reduction <add>, %10, %cst_5 [1] : vector<2x8xf32> to vector<2xf32>
    %12 = vector.shape_cast %11 : vector<2xf32> to vector<2x1xf32>
    %13 = vector.shape_cast %10 : vector<2x8xf32> to vector<2x1x8xf32>
    "tpu.trace_start"() <{level = 10 : i32, message = "bqt,bth->bqh"}> : () -> ()
    %cst_6 = arith.constant dense<0.000000e+00> : vector<2x1x32xf32>
    %14 = tpu.matmul %13, %0, %cst_6 {dimension_numbers = #tpu.dot_dimension_numbers<[2], [1], [1], [2], [0, 0, 0, 1, 1, 2], [0], [0]>, precision = #tpu.contract_precision<fp32>} : vector<2x1x8xf32>, vector<2x8x32xf32>, vector<2x1x32xf32> -> vector<2x1x32xf32>
    "tpu.trace_stop"() : () -> ()
    %15 = vector.shape_cast %14 : vector<2x1x32xf32> to vector<2x32xf32>
    %16 = tpu.reciprocal %12 : vector<2x1xf32> -> vector<2x1xf32>
    %17 = vector.broadcast %16 : vector<2x1xf32> to vector<2x32xf32>
    %18 = arith.mulf %15, %17 : vector<2x32xf32>
    %c0_7 = arith.constant 0 : index
    %c0_8 = arith.constant 0 : index
    %19 = vector.load %arg3[%c0_7, %c0_8] : memref<2x32xf32, #tpu.memory_space<vmem>>, vector<2x32xf32>
    tpu.vector_store %arg3[%c0_7, %c0_8], %18 {strides = array<i32>} : memref<2x32xf32, #tpu.memory_space<vmem>>, vector<2x32xf32>,
    return
  }
  func.func @transform_0(%arg0: i32) -> (i32, i32, i32) {
    %c0_i32 = arith.constant 0 : i32
    %c0_i32_0 = arith.constant 0 : i32
    %c0_i32_1 = arith.constant 0 : i32
    return %arg0, %c0_i32, %c0_i32_0 : i32, i32, i32
  }
  func.func @transform_1(%arg0: i32) -> (i32, i32) {
    %c0_i32 = arith.constant 0 : i32
    %c0_i32_0 = arith.constant 0 : i32
    %c0_i32_1 = arith.constant 0 : i32
    return %c0_i32, %c0_i32_0 : i32, i32
  }
  func.func @transform_2(%arg0: i32) -> (i32, i32) {
    %c0_i32 = arith.constant 0 : i32
    %c0_i32_0 = arith.constant 0 : i32
    return %arg0, %c0_i32 : i32, i32
  }
}

</mosaic_0001>

<llo_original>
// kernel: tpu_custom_call.1
$region0: #{tpu_custom_call.1}
  #allocation0 [shape = 'u32[]', space=smem, size = 0x4, offset = 0x4, fixed_abs, tag = 'smem constant byte address 0x4 - core index']
  #allocation1 [shape = 'u32[144,128]{1,0:T(1,128)}', space=vmem, size = 0x12000, scoped, tag = 'internal scratch']
  %s0 = inlined_call_operand.hbm [shape: f32[2,8,32], index: 0, kind: input, shape index: {}]
  %s1 = inlined_call_operand.vmem [shape: f32[1,32], index: 1, kind: input, shape index: {}]
  %s2 = inlined_call_operand.hbm [shape: f32[2,32], index: 2, kind: output, shape index: {}]
  %s3 = sld [smem:[#allocation0]]
  $region22: #{tpu_custom_call.1} parent=0
    _
  %s5 = ssub.s32 1, %s3
  %s6 = scalar_select 0, %s5, %s3
  $region1: #{tpu_custom_call.1} parent=0
    #allocation2 [shape = 'u8[8192]{0}', space=vmem, size = 0x2000, scoped, tag = 'input window, operand 0, single buffered']
    #allocation3 [shape = 's32[1]{0}', space=sflag, size = 0x4, scoped, tag = 'scoped memory for tpu_custom_call.1']
    #allocation4 [shape = 's32[1]{0}', space=sflag, size = 0x4, scoped, tag = 'scoped memory for tpu_custom_call.1']
    #allocation5 [shape = 'u8[1024]{0}', space=vmem, size = 0x400, scoped, tag = 'output window, operand 0, single buffered']
    %7 = vsyncpa [#allocation3], 0
    %8 = vsyncpa [#allocation4], 0
    // Predicated region
    $region2: #{tpu_custom_call.1} parent=1 // pred_check
      _
    $region3: #{tpu_custom_call.1} parent=1 // pred_check_branch
      %10 = sbr.rel (0) target = $region5
    $region4: #{tpu_custom_call.1} parent=1 // pred_region
      %s12 = ssub.s32 256, 256
      %13 = vsyncadd [#allocation3], %s12
      %s14 = sshll.u32 [#allocation2], 4
      %s15 = int_to_ptr.vmem [resolvable:$true] %s14
      %20 = dma.hbm_to_vmem [thread:$0]  %s0, 256, %s15, [#allocation3], 128, 128, 8
    $region5: #{tpu_custom_call.1} parent=1 // pred_fallthru
      _
    // Predicated region
    $region6: #{tpu_custom_call.1} parent=1 // pred_check
      _
    $region7: #{tpu_custom_call.1} parent=1 // pred_check_branch
      %22 = sbr.rel (0) target = $region9
    $region8: #{tpu_custom_call.1} parent=1 // pred_region
      _
    $region9: #{tpu_custom_call.1} parent=1 // pred_fallthru
      _
    // Predicated region
    $region10: #{tpu_custom_call.1} parent=1 // pred_check
      _
    $region11: #{tpu_custom_call.1} parent=1 // pred_check_branch
      %24 = sbr.rel (0) target = $region13
    $region12: #{tpu_custom_call.1} parent=1 // pred_region
      %25 = dma.done [#allocation3], 256
    $region13: #{tpu_custom_call.1} parent=1 // pred_fallthru
      _
    %v26 = vld [vmem:[#allocation2] sm:$0xff]
    %v27 = vld [vmem:[#allocation2 + $0x8] sm:$0xff]
    %v28 = vld [vmem:[%s1] sm:$0x1]
    %v30 = vlaneseq
    %v31 = vshrl.u32 %v30, 7
    %v32 = vsub.s32 0, %v31
    %v33 = vrot.slane %v28, %v32
    %v35 = vmul.f32 %v26, %v33
    %v36 = vmul.f32 %v27, %v33
    %vm37 = vcmask 261120
    %v38 = vsel %vm37, %v35, 0.0
    %39 = vadd.xlane.f32.xlu0 %v38
    %v40 = vpop.xlane.xlu0 %39
    %v41 = vsel %vm37, %v36, 0.0
    %42 = vadd.xlane.f32.xlu0 %v41
    %v43 = vpop.xlane.xlu0 %42
    %v46 = vlaneseq
    %v47 = vand.u32 %v46, 127
    %v48 = vlaneseq
    %v49 = vshrl.u32 %v48, 7
    %v50 = vsub.s32 %v47, %v49
    %v51 = vrot.slane %v40, %v50
    %v52 = vlaneseq
    %v53 = vshrl.u32 %v52, 7
    %v54 = vsub.s32 %v47, %v53
    %v55 = vrot.slane %v43, %v54
    %vm56 = vcmask 1041409
    %v57 = vsel %vm56, %v55, %v51
    %vm59 = vcmask 58368
    %v60 = vsel %vm59, %v57, -inf
    %61 = vmax.xlane.f32.xlu0 %v60
    %v62 = vpop.xlane.xlu0 %61
    %v64 = vlaneseq
    %v65 = vshrl.u32 %v64, 7
    %v66 = vsub.s32 0, %v65
    %v67 = vrot.slane %v62, %v66
    %v68 = vlaneseq
    %v69 = vshrl.u32 %v68, 7
    %v70 = vsub.s32 1, %v69
    %v71 = vrot.slane %v62, %v70
    %v74 = vsub.f32 %v40, %v67
    %v75 = vsub.f32 %v43, %v71
    %v76 = vmul.f32 %v74, 1.442695
    %v77 = vpow.pop %v76
    %v78 = vmul.f32 %v75, 1.442695
    %v79 = vpow.pop %v78
    %82 = vset.pattern.permute.xlu0 0
    %83 = vperm.xlu0 %82, %v77
    %v84 = vpop.permute.xlu0 %83
    %85 = vset.pattern.permute.xlu0 0
    %86 = vperm.xlu0 %85, %v79
    %v87 = vpop.permute.xlu0 %86
    %v88 = vlaneseq
    %v89 = vshrl.u32 %v88, 7
    %v90 = vsub.s32 %v47, %v89
    %v91 = vrot.slane %v84, %v90
    %v92 = vlaneseq
    %v93 = vshrl.u32 %v92, 7
    %v94 = vsub.s32 %v47, %v93
    %v95 = vrot.slane %v87, %v94
    %v96 = vsel %vm56, %v95, %v91
    %v98 = vsel %vm59, %v96, 0.0
    %99 = vadd.xlane.f32.xlu0 %v98
    %v100 = vpop.xlane.xlu0 %99
    %vm101 = vcmask 64512
    %v102 = vsel %vm101, %v91, 0
    %104 = vmatprep.subr.mxu0 0.0
    %105 = vmatpush1.msra.mxu0 0.0
    %106 = vmatprep.subr.mxu0 0.0
    %107 = vmatpush1.msra.mxu0 0.0
    %108 = vmatprep.subr.mxu0 0.0
    %109 = vmatpush1.msra.mxu0 0.0
    %110 = vmatprep.subr.mxu0 0.0
    %111 = vmatpush1.msra.mxu0 0.0
    %112 = vmatprep.subr.mxu0 0.0
    %113 = vmatpush1.msra.mxu0 0.0
    %114 = vmatprep.subr.mxu0 0.0
    %115 = vmatpush1.msra.mxu0 0.0
    %116 = vmatprep.subr.mxu0 0.0
    %117 = vmatpush1.msra.mxu0 0.0
    %118 = vmatprep.subr.mxu0 0.0
    %119 = vmatpush1.msra.mxu0 0.0
    %120 = vmatprep.subr.mxu0 0.0
    %121 = vmatpush1.msra.mxu0 0.0
    %122 = vmatprep.subr.mxu0 0.0
    %123 = vmatpush1.msra.mxu0 0.0
    %124 = vmatprep.subr.mxu0 0.0
    %125 = vmatpush1.msra.mxu0 0.0
    %126 = vmatprep.subr.mxu0 0.0
    %127 = vmatpush1.msra.mxu0 0.0
    %128 = vmatprep.subr.mxu0 0.0
    %129 = vmatpush1.msra.mxu0 0.0
    %130 = vmatprep.subr.mxu0 0.0
    %131 = vmatpush1.msra.mxu0 0.0
    %132 = vmatprep.subr.mxu0 0.0
    %133 = vmatpush1.msra.mxu0 0.0
    %134 = vmatprep.subr.mxu0 0.0
    %v135 = vand.u32 %v26, 4294901760
    %136 = vmatpush1.msra.mxu0 %v135
    %137 = vmatprep.subr.mxu0 0.0
    %138 = vmatpush2.msra.mxu0 0.0
    %139 = vmatprep.subr.mxu0 0.0
    %140 = vmatpush2.msra.mxu0 0.0
    %141 = vmatprep.subr.mxu0 0.0
    %142 = vmatpush2.msra.mxu0 0.0
    %143 = vmatprep.subr.mxu0 0.0
    %144 = vmatpush2.msra.mxu0 0.0
    %145 = vmatprep.subr.mxu0 0.0
    %146 = vmatpush2.msra.mxu0 0.0
    %147 = vmatprep.subr.mxu0 0.0
    %148 = vmatpush2.msra.mxu0 0.0
    %149 = vmatprep.subr.mxu0 0.0
    %150 = vmatpush2.msra.mxu0 0.0
    %151 = vmatprep.subr.mxu0 0.0
    %152 = vmatpush2.msra.mxu0 0.0
    %153 = vmatprep.subr.mxu0 0.0
    %154 = vmatpush2.msra.mxu0 0.0
    %155 = vmatprep.subr.mxu0 0.0
    %156 = vmatpush2.msra.mxu0 0.0
    %157 = vmatprep.subr.mxu0 0.0
    %158 = vmatpush2.msra.mxu0 0.0
    %159 = vmatprep.subr.mxu0 0.0
    %160 = vmatpush2.msra.mxu0 0.0
    %161 = vmatprep.subr.mxu0 0.0
    %162 = vmatpush2.msra.mxu0 0.0
    %163 = vmatprep.subr.mxu0 0.0
    %164 = vmatpush2.msra.mxu0 0.0
    %165 = vmatprep.subr.mxu0 0.0
    %166 = vmatpush2.msra.mxu0 0.0
    %167 = vmatprep.subr.mxu0 0.0
    %168 = vmatpush2.msra.mxu0 0.0
    %169 = vmatprep.mubr.f32.mxu0 0.0
    %v170 = vand.u32 %v102, 4294901760
    %v171 = vsub.f32 %v102, %v170
    %v172 = vand.u32 %v171, 4294901760
    %v173 = vsub.f32 %v171, %v172
    %v174 = vand.u32 %v173, 4294901760
    %175 = vmatmul.mubr.f32.gmra.mxu0 %v174
    %v176 = vpop.f32.mrf.mxu0
    %v177 = vadd.f32 0.0, %v176
    %v178 = vpop.f32.mrf.mxu0
    %179 = vdwg.mxu0
    %180 = vmatprep.subr.mxu0 0.0
    %181 = vmatpush1.msra.mxu0 0.0
    %182 = vmatprep.subr.mxu0 0.0
    %183 = vmatpush1.msra.mxu0 0.0
    %184 = vmatprep.subr.mxu0 0.0
    %185 = vmatpush1.msra.mxu0 0.0
    %186 = vmatprep.subr.mxu0 0.0
    %187 = vmatpush1.msra.mxu0 0.0
    %188 = vmatprep.subr.mxu0 0.0
    %189 = vmatpush1.msra.mxu0 0.0
    %190 = vmatprep.subr.mxu0 0.0
    %191 = vmatpush1.msra.mxu0 0.0
    %192 = vmatprep.subr.mxu0 0.0
    %193 = vmatpush1.msra.mxu0 0.0
    %194 = vmatprep.subr.mxu0 0.0
    %195 = vmatpush1.msra.mxu0 0.0
    %196 = vmatprep.subr.mxu0 0.0
    %197 = vmatpush1.msra.mxu0 0.0
    %198 = vmatprep.subr.mxu0 0.0
    %199 = vmatpush1.msra.mxu0 0.0
    %200 = vmatprep.subr.mxu0 0.0
    %201 = vmatpush1.msra.mxu0 0.0
    %202 = vmatprep.subr.mxu0 0.0
    %203 = vmatpush1.msra.mxu0 0.0
    %204 = vmatprep.subr.mxu0 0.0
    %205 = vmatpush1.msra.mxu0 0.0
    %206 = vmatprep.subr.mxu0 0.0
    %207 = vmatpush1.msra.mxu0 0.0
    %208 = vmatprep.subr.mxu0 0.0
    %209 = vmatpush1.msra.mxu0 0.0
    %210 = vmatprep.subr.mxu0 0.0
    %v211 = vand.u32 %v26, 4294901760
    %v212 = vsub.f32 %v26, %v211
    %v213 = vand.u32 %v212, 4294901760
    %v214 = vsub.f32 %v212, %v213
    %v215 = vand.u32 %v214, 4294901760
    %216 = vmatpush1.msra.mxu0 %v215
    %217 = vmatprep.subr.mxu0 0.0
    %218 = vmatpush2.msra.mxu0 0.0
    %219 = vmatprep.subr.mxu0 0.0
    %220 = vmatpush2.msra.mxu0 0.0
    %221 = vmatprep.subr.mxu0 0.0
    %222 = vmatpush2.msra.mxu0 0.0
    %223 = vmatprep.subr.mxu0 0.0
    %224 = vmatpush2.msra.mxu0 0.0
    %225 = vmatprep.subr.mxu0 0.0
    %226 = vmatpush2.msra.mxu0 0.0
    %227 = vmatprep.subr.mxu0 0.0
    %228 = vmatpush2.msra.mxu0 0.0
    %229 = vmatprep.subr.mxu0 0.0
    %230 = vmatpush2.msra.mxu0 0.0
    %231 = vmatprep.subr.mxu0 0.0
    %232 = vmatpush2.msra.mxu0 0.0
    %233 = vmatprep.subr.mxu0 0.0
    %234 = vmatpush2.msra.mxu0 0.0
    %235 = vmatprep.subr.mxu0 0.0
    %236 = vmatpush2.msra.mxu0 0.0
    %237 = vmatprep.subr.mxu0 0.0
    %238 = vmatpush2.msra.mxu0 0.0
    %239 = vmatprep.subr.mxu0 0.0
    %240 = vmatpush2.msra.mxu0 0.0
    %241 = vmatprep.subr.mxu0 0.0
    %242 = vmatpush2.msra.mxu0 0.0
    %243 = vmatprep.subr.mxu0 0.0
    %244 = vmatpush2.msra.mxu0 0.0
    %245 = vmatprep.subr.mxu0 0.0
    %246 = vmatpush2.msra.mxu0 0.0
    %247 = vmatprep.subr.mxu0 0.0
    %248 = vmatpush2.msra.mxu0 0.0
    %249 = vmatprep.mubr.f32.mxu0 0.0
    %v250 = vand.u32 %v102, 4294901760
    %251 = vmatmul.mubr.f32.gmra.mxu0 %v250
    %v252 = vpop.f32.mrf.mxu0
    %v253 = vadd.f32 %v177, %v252
    %v254 = vpop.f32.mrf.mxu0
    %255 = vdwg.mxu0
    %256 = vmatprep.subr.mxu0 0.0
    %257 = vmatpush1.msra.mxu0 0.0
    %258 = vmatprep.subr.mxu0 0.0
    %259 = vmatpush1.msra.mxu0 0.0
    %260 = vmatprep.subr.mxu0 0.0
    %261 = vmatpush1.msra.mxu0 0.0
    %262 = vmatprep.subr.mxu0 0.0
    %263 = vmatpush1.msra.mxu0 0.0
    %264 = vmatprep.subr.mxu0 0.0
    %265 = vmatpush1.msra.mxu0 0.0
    %266 = vmatprep.subr.mxu0 0.0
    %267 = vmatpush1.msra.mxu0 0.0
    %268 = vmatprep.subr.mxu0 0.0
    %269 = vmatpush1.msra.mxu0 0.0
    %270 = vmatprep.subr.mxu0 0.0
    %271 = vmatpush1.msra.mxu0 0.0
    %272 = vmatprep.subr.mxu0 0.0
    %273 = vmatpush1.msra.mxu0 0.0
    %274 = vmatprep.subr.mxu0 0.0
    %275 = vmatpush1.msra.mxu0 0.0
    %276 = vmatprep.subr.mxu0 0.0
    %277 = vmatpush1.msra.mxu0 0.0
    %278 = vmatprep.subr.mxu0 0.0
    %279 = vmatpush1.msra.mxu0 0.0
    %280 = vmatprep.subr.mxu0 0.0
    %281 = vmatpush1.msra.mxu0 0.0
    %282 = vmatprep.subr.mxu0 0.0
    %283 = vmatpush1.msra.mxu0 0.0
    %284 = vmatprep.subr.mxu0 0.0
    %285 = vmatpush1.msra.mxu0 0.0
    %286 = vmatprep.subr.mxu0 0.0
    %v287 = vand.u32 %v26, 4294901760
    %v288 = vsub.f32 %v26, %v287
    %289 = vmatpush1.msra.mxu0 %v288
    %290 = vmatprep.subr.mxu0 0.0
    %291 = vmatpush2.msra.mxu0 0.0
    %292 = vmatprep.subr.mxu0 0.0
    %293 = vmatpush2.msra.mxu0 0.0
    %294 = vmatprep.subr.mxu0 0.0
    %295 = vmatpush2.msra.mxu0 0.0
    %296 = vmatprep.subr.mxu0 0.0
    %297 = vmatpush2.msra.mxu0 0.0
    %298 = vmatprep.subr.mxu0 0.0
    %299 = vmatpush2.msra.mxu0 0.0
    %300 = vmatprep.subr.mxu0 0.0
    %301 = vmatpush2.msra.mxu0 0.0
    %302 = vmatprep.subr.mxu0 0.0
    %303 = vmatpush2.msra.mxu0 0.0
    %304 = vmatprep.subr.mxu0 0.0
    %305 = vmatpush2.msra.mxu0 0.0
    %306 = vmatprep.subr.mxu0 0.0
    %307 = vmatpush2.msra.mxu0 0.0
    %308 = vmatprep.subr.mxu0 0.0
    %309 = vmatpush2.msra.mxu0 0.0
    %310 = vmatprep.subr.mxu0 0.0
    %311 = vmatpush2.msra.mxu0 0.0
    %312 = vmatprep.subr.mxu0 0.0
    %313 = vmatpush2.msra.mxu0 0.0
    %314 = vmatprep.subr.mxu0 0.0
    %315 = vmatpush2.msra.mxu0 0.0
    %316 = vmatprep.subr.mxu0 0.0
    %317 = vmatpush2.msra.mxu0 0.0
    %318 = vmatprep.subr.mxu0 0.0
    %319 = vmatpush2.msra.mxu0 0.0
    %320 = vmatprep.subr.mxu0 0.0
    %321 = vmatpush2.msra.mxu0 0.0
    %322 = vmatprep.mubr.f32.mxu0 0.0
    %v323 = vand.u32 %v102, 4294901760
    %v324 = vsub.f32 %v102, %v323
    %325 = vmatmul.mubr.f32.gmra.mxu0 %v324
    %v326 = vpop.f32.mrf.mxu0
    %v327 = vadd.f32 %v253, %v326
    %v328 = vpop.f32.mrf.mxu0
    %329 = vdwg.mxu0
    %330 = vmatprep.subr.mxu0 0.0
    %331 = vmatpush1.msra.mxu0 0.0
    %332 = vmatprep.subr.mxu0 0.0
    %333 = vmatpush1.msra.mxu0 0.0
    %334 = vmatprep.subr.mxu0 0.0
    %335 = vmatpush1.msra.mxu0 0.0
    %336 = vmatprep.subr.mxu0 0.0
    %337 = vmatpush1.msra.mxu0 0.0
    %338 = vmatprep.subr.mxu0 0.0
    %339 = vmatpush1.msra.mxu0 0.0
    %340 = vmatprep.subr.mxu0 0.0
    %341 = vmatpush1.msra.mxu0 0.0
    %342 = vmatprep.subr.mxu0 0.0
    %343 = vmatpush1.msra.mxu0 0.0
    %344 = vmatprep.subr.mxu0 0.0
    %345 = vmatpush1.msra.mxu0 0.0
    %346 = vmatprep.subr.mxu0 0.0
    %347 = vmatpush1.msra.mxu0 0.0
    %348 = vmatprep.subr.mxu0 0.0
    %349 = vmatpush1.msra.mxu0 0.0
    %350 = vmatprep.subr.mxu0 0.0
    %351 = vmatpush1.msra.mxu0 0.0
    %352 = vmatprep.subr.mxu0 0.0
    %353 = vmatpush1.msra.mxu0 0.0
    %354 = vmatprep.subr.mxu0 0.0
    %355 = vmatpush1.msra.mxu0 0.0
    %356 = vmatprep.subr.mxu0 0.0
    %357 = vmatpush1.msra.mxu0 0.0
    %358 = vmatprep.subr.mxu0 0.0
    %359 = vmatpush1.msra.mxu0 0.0
    %360 = vmatprep.subr.mxu0 0.0
    %v361 = vand.u32 %v26, 4294901760
    %362 = vmatpush1.msra.mxu0 %v361
    %363 = vmatprep.subr.mxu0 0.0
    %364 = vmatpush2.msra.mxu0 0.0
    %365 = vmatprep.subr.mxu0 0.0
    %366 = vmatpush2.msra.mxu0 0.0
    %367 = vmatprep.subr.mxu0 0.0
    %368 = vmatpush2.msra.mxu0 0.0
    %369 = vmatprep.subr.mxu0 0.0
    %370 = vmatpush2.msra.mxu0 0.0
    %371 = vmatprep.subr.mxu0 0.0
    %372 = vmatpush2.msra.mxu0 0.0
    %373 = vmatprep.subr.mxu0 0.0
    %374 = vmatpush2.msra.mxu0 0.0
    %375 = vmatprep.subr.mxu0 0.0
    %376 = vmatpush2.msra.mxu0 0.0
    %377 = vmatprep.subr.mxu0 0.0
    %378 = vmatpush2.msra.mxu0 0.0
    %379 = vmatprep.subr.mxu0 0.0
    %380 = vmatpush2.msra.mxu0 0.0
    %381 = vmatprep.subr.mxu0 0.0
    %382 = vmatpush2.msra.mxu0 0.0
    %383 = vmatprep.subr.mxu0 0.0
    %384 = vmatpush2.msra.mxu0 0.0
    %385 = vmatprep.subr.mxu0 0.0
    %386 = vmatpush2.msra.mxu0 0.0
    %387 = vmatprep.subr.mxu0 0.0
    %388 = vmatpush2.msra.mxu0 0.0
    %389 = vmatprep.subr.mxu0 0.0
    %390 = vmatpush2.msra.mxu0 0.0
    %391 = vmatprep.subr.mxu0 0.0
    %392 = vmatpush2.msra.mxu0 0.0
    %393 = vmatprep.subr.mxu0 0.0
    %394 = vmatpush2.msra.mxu0 0.0
    %395 = vmatprep.mubr.f32.mxu0 0.0
    %v396 = vand.u32 %v102, 4294901760
    %v397 = vsub.f32 %v102, %v396
    %v398 = vand.u32 %v397, 4294901760
    %399 = vmatmul.mubr.f32.gmra.mxu0 %v398
    %v400 = vpop.f32.mrf.mxu0
    %v401 = vadd.f32 %v327, %v400
    %v402 = vpop.f32.mrf.mxu0
    %403 = vdwg.mxu0
    %404 = vmatprep.subr.mxu0 0.0
    %405 = vmatpush1.msra.mxu0 0.0
    %406 = vmatprep.subr.mxu0 0.0
    %407 = vmatpush1.msra.mxu0 0.0
    %408 = vmatprep.subr.mxu0 0.0
    %409 = vmatpush1.msra.mxu0 0.0
    %410 = vmatprep.subr.mxu0 0.0
    %411 = vmatpush1.msra.mxu0 0.0
    %412 = vmatprep.subr.mxu0 0.0
    %413 = vmatpush1.msra.mxu0 0.0
    %414 = vmatprep.subr.mxu0 0.0
    %415 = vmatpush1.msra.mxu0 0.0
    %416 = vmatprep.subr.mxu0 0.0
    %417 = vmatpush1.msra.mxu0 0.0
    %418 = vmatprep.subr.mxu0 0.0
    %419 = vmatpush1.msra.mxu0 0.0
    %420 = vmatprep.subr.mxu0 0.0
    %421 = vmatpush1.msra.mxu0 0.0
    %422 = vmatprep.subr.mxu0 0.0
    %423 = vmatpush1.msra.mxu0 0.0
    %424 = vmatprep.subr.mxu0 0.0
    %425 = vmatpush1.msra.mxu0 0.0
    %426 = vmatprep.subr.mxu0 0.0
    %427 = vmatpush1.msra.mxu0 0.0
    %428 = vmatprep.subr.mxu0 0.0
    %429 = vmatpush1.msra.mxu0 0.0
    %430 = vmatprep.subr.mxu0 0.0
    %431 = vmatpush1.msra.mxu0 0.0
    %432 = vmatprep.subr.mxu0 0.0
    %433 = vmatpush1.msra.mxu0 0.0
    %434 = vmatprep.subr.mxu0 0.0
    %v435 = vand.u32 %v26, 4294901760
    %v436 = vsub.f32 %v26, %v435
    %v437 = vand.u32 %v436, 4294901760
    %438 = vmatpush1.msra.mxu0 %v437
    %439 = vmatprep.subr.mxu0 0.0
    %440 = vmatpush2.msra.mxu0 0.0
    %441 = vmatprep.subr.mxu0 0.0
    %442 = vmatpush2.msra.mxu0 0.0
    %443 = vmatprep.subr.mxu0 0.0
    %444 = vmatpush2.msra.mxu0 0.0
    %445 = vmatprep.subr.mxu0 0.0
    %446 = vmatpush2.msra.mxu0 0.0
    %447 = vmatprep.subr.mxu0 0.0
    %448 = vmatpush2.msra.mxu0 0.0
    %449 = vmatprep.subr.mxu0 0.0
    %450 = vmatpush2.msra.mxu0 0.0
    %451 = vmatprep.subr.mxu0 0.0
    %452 = vmatpush2.msra.mxu0 0.0
    %453 = vmatprep.subr.mxu0 0.0
    %454 = vmatpush2.msra.mxu0 0.0
    %455 = vmatprep.subr.mxu0 0.0
    %456 = vmatpush2.msra.mxu0 0.0
    %457 = vmatprep.subr.mxu0 0.0
    %458 = vmatpush2.msra.mxu0 0.0
    %459 = vmatprep.subr.mxu0 0.0
    %460 = vmatpush2.msra.mxu0 0.0
    %461 = vmatprep.subr.mxu0 0.0
    %462 = vmatpush2.msra.mxu0 0.0
    %463 = vmatprep.subr.mxu0 0.0
    %464 = vmatpush2.msra.mxu0 0.0
    %465 = vmatprep.subr.mxu0 0.0
    %466 = vmatpush2.msra.mxu0 0.0
    %467 = vmatprep.subr.mxu0 0.0
    %468 = vmatpush2.msra.mxu0 0.0
    %469 = vmatprep.subr.mxu0 0.0
    %470 = vmatpush2.msra.mxu0 0.0
    %471 = vmatprep.mubr.f32.mxu0 0.0
    %v472 = vand.u32 %v102, 4294901760
    %473 = vmatmul.mubr.f32.gmra.mxu0 %v472
    %v474 = vpop.f32.mrf.mxu0
    %v475 = vadd.f32 %v401, %v474
    %v476 = vpop.f32.mrf.mxu0
    %477 = vdwg.mxu0
    %478 = vmatprep.subr.mxu0 0.0
    %479 = vmatpush1.msra.mxu0 0.0
    %480 = vmatprep.subr.mxu0 0.0
    %481 = vmatpush1.msra.mxu0 0.0
    %482 = vmatprep.subr.mxu0 0.0
    %483 = vmatpush1.msra.mxu0 0.0
    %484 = vmatprep.subr.mxu0 0.0
    %485 = vmatpush1.msra.mxu0 0.0
    %486 = vmatprep.subr.mxu0 0.0
    %487 = vmatpush1.msra.mxu0 0.0
    %488 = vmatprep.subr.mxu0 0.0
    %489 = vmatpush1.msra.mxu0 0.0
    %490 = vmatprep.subr.mxu0 0.0
    %491 = vmatpush1.msra.mxu0 0.0
    %492 = vmatprep.subr.mxu0 0.0
    %493 = vmatpush1.msra.mxu0 0.0
    %494 = vmatprep.subr.mxu0 0.0
    %495 = vmatpush1.msra.mxu0 0.0
    %496 = vmatprep.subr.mxu0 0.0
    %497 = vmatpush1.msra.mxu0 0.0
    %498 = vmatprep.subr.mxu0 0.0
    %499 = vmatpush1.msra.mxu0 0.0
    %500 = vmatprep.subr.mxu0 0.0
    %501 = vmatpush1.msra.mxu0 0.0
    %502 = vmatprep.subr.mxu0 0.0
    %503 = vmatpush1.msra.mxu0 0.0
    %504 = vmatprep.subr.mxu0 0.0
    %505 = vmatpush1.msra.mxu0 0.0
    %506 = vmatprep.subr.mxu0 0.0
    %507 = vmatpush1.msra.mxu0 0.0
    %508 = vmatprep.subr.mxu0 0.0
    %v509 = vand.u32 %v26, 4294901760
    %510 = vmatpush1.msra.mxu0 %v509
    %511 = vmatprep.subr.mxu0 0.0
    %512 = vmatpush2.msra.mxu0 0.0
    %513 = vmatprep.subr.mxu0 0.0
    %514 = vmatpush2.msra.mxu0 0.0
    %515 = vmatprep.subr.mxu0 0.0
    %516 = vmatpush2.msra.mxu0 0.0
    %517 = vmatprep.subr.mxu0 0.0
    %518 = vmatpush2.msra.mxu0 0.0
    %519 = vmatprep.subr.mxu0 0.0
    %520 = vmatpush2.msra.mxu0 0.0
    %521 = vmatprep.subr.mxu0 0.0
    %522 = vmatpush2.msra.mxu0 0.0
    %523 = vmatprep.subr.mxu0 0.0
    %524 = vmatpush2.msra.mxu0 0.0
    %525 = vmatprep.subr.mxu0 0.0
    %526 = vmatpush2.msra.mxu0 0.0
    %527 = vmatprep.subr.mxu0 0.0
    %528 = vmatpush2.msra.mxu0 0.0
    %529 = vmatprep.subr.mxu0 0.0
    %530 = vmatpush2.msra.mxu0 0.0
    %531 = vmatprep.subr.mxu0 0.0
    %532 = vmatpush2.msra.mxu0 0.0
    %533 = vmatprep.subr.mxu0 0.0
    %534 = vmatpush2.msra.mxu0 0.0
    %535 = vmatprep.subr.mxu0 0.0
    %536 = vmatpush2.msra.mxu0 0.0
    %537 = vmatprep.subr.mxu0 0.0
    %538 = vmatpush2.msra.mxu0 0.0
    %539 = vmatprep.subr.mxu0 0.0
    %540 = vmatpush2.msra.mxu0 0.0
    %541 = vmatprep.subr.mxu0 0.0
    %542 = vmatpush2.msra.mxu0 0.0
    %543 = vmatprep.mubr.f32.mxu0 0.0
    %v544 = vand.u32 %v102, 4294901760
    %545 = vmatmul.mubr.f32.gmra.mxu0 %v544
    %v546 = vpop.f32.mrf.mxu0
    %v547 = vadd.f32 %v475, %v546
    %v548 = vpop.f32.mrf.mxu0
    %549 = vdwg.mxu0
    %v550 = vsel %vm101, %v95, 0
    %552 = vmatprep.subr.mxu0 0.0
    %553 = vmatpush1.msra.mxu0 0.0
    %554 = vmatprep.subr.mxu0 0.0
    %555 = vmatpush1.msra.mxu0 0.0
    %556 = vmatprep.subr.mxu0 0.0
    %557 = vmatpush1.msra.mxu0 0.0
    %558 = vmatprep.subr.mxu0 0.0
    %559 = vmatpush1.msra.mxu0 0.0
    %560 = vmatprep.subr.mxu0 0.0
    %561 = vmatpush1.msra.mxu0 0.0
    %562 = vmatprep.subr.mxu0 0.0
    %563 = vmatpush1.msra.mxu0 0.0
    %564 = vmatprep.subr.mxu0 0.0
    %565 = vmatpush1.msra.mxu0 0.0
    %566 = vmatprep.subr.mxu0 0.0
    %567 = vmatpush1.msra.mxu0 0.0
    %568 = vmatprep.subr.mxu0 0.0
    %569 = vmatpush1.msra.mxu0 0.0
    %570 = vmatprep.subr.mxu0 0.0
    %571 = vmatpush1.msra.mxu0 0.0
    %572 = vmatprep.subr.mxu0 0.0
    %573 = vmatpush1.msra.mxu0 0.0
    %574 = vmatprep.subr.mxu0 0.0
    %575 = vmatpush1.msra.mxu0 0.0
    %576 = vmatprep.subr.mxu0 0.0
    %577 = vmatpush1.msra.mxu0 0.0
    %578 = vmatprep.subr.mxu0 0.0
    %579 = vmatpush1.msra.mxu0 0.0
    %580 = vmatprep.subr.mxu0 0.0
    %581 = vmatpush1.msra.mxu0 0.0
    %582 = vmatprep.subr.mxu0 0.0
    %v583 = vand.u32 %v27, 4294901760
    %584 = vmatpush1.msra.mxu0 %v583
    %585 = vmatprep.subr.mxu0 0.0
    %586 = vmatpush2.msra.mxu0 0.0
    %587 = vmatprep.subr.mxu0 0.0
    %588 = vmatpush2.msra.mxu0 0.0
    %589 = vmatprep.subr.mxu0 0.0
    %590 = vmatpush2.msra.mxu0 0.0
    %591 = vmatprep.subr.mxu0 0.0
    %592 = vmatpush2.msra.mxu0 0.0
    %593 = vmatprep.subr.mxu0 0.0
    %594 = vmatpush2.msra.mxu0 0.0
    %595 = vmatprep.subr.mxu0 0.0
    %596 = vmatpush2.msra.mxu0 0.0
    %597 = vmatprep.subr.mxu0 0.0
    %598 = vmatpush2.msra.mxu0 0.0
    %599 = vmatprep.subr.mxu0 0.0
    %600 = vmatpush2.msra.mxu0 0.0
    %601 = vmatprep.subr.mxu0 0.0
    %602 = vmatpush2.msra.mxu0 0.0
    %603 = vmatprep.subr.mxu0 0.0
    %604 = vmatpush2.msra.mxu0 0.0
    %605 = vmatprep.subr.mxu0 0.0
    %606 = vmatpush2.msra.mxu0 0.0
    %607 = vmatprep.subr.mxu0 0.0
    %608 = vmatpush2.msra.mxu0 0.0
    %609 = vmatprep.subr.mxu0 0.0
    %610 = vmatpush2.msra.mxu0 0.0
    %611 = vmatprep.subr.mxu0 0.0
    %612 = vmatpush2.msra.mxu0 0.0
    %613 = vmatprep.subr.mxu0 0.0
    %614 = vmatpush2.msra.mxu0 0.0
    %615 = vmatprep.subr.mxu0 0.0
    %616 = vmatpush2.msra.mxu0 0.0
    %617 = vmatprep.mubr.f32.mxu0 0.0
    %v618 = vand.u32 %v550, 4294901760
    %v619 = vsub.f32 %v550, %v618
    %v620 = vand.u32 %v619, 4294901760
    %v621 = vsub.f32 %v619, %v620
    %v622 = vand.u32 %v621, 4294901760
    %623 = vmatmul.mubr.f32.gmra.mxu0 %v622
    %v624 = vpop.f32.mrf.mxu0
    %v625 = vadd.f32 0.0, %v624
    %v626 = vpop.f32.mrf.mxu0
    %627 = vdwg.mxu0
    %628 = vmatprep.subr.mxu0 0.0
    %629 = vmatpush1.msra.mxu0 0.0
    %630 = vmatprep.subr.mxu0 0.0
    %631 = vmatpush1.msra.mxu0 0.0
    %632 = vmatprep.subr.mxu0 0.0
    %633 = vmatpush1.msra.mxu0 0.0
    %634 = vmatprep.subr.mxu0 0.0
    %635 = vmatpush1.msra.mxu0 0.0
    %636 = vmatprep.subr.mxu0 0.0
    %637 = vmatpush1.msra.mxu0 0.0
    %638 = vmatprep.subr.mxu0 0.0
    %639 = vmatpush1.msra.mxu0 0.0
    %640 = vmatprep.subr.mxu0 0.0
    %641 = vmatpush1.msra.mxu0 0.0
    %642 = vmatprep.subr.mxu0 0.0
    %643 = vmatpush1.msra.mxu0 0.0
    %644 = vmatprep.subr.mxu0 0.0
    %645 = vmatpush1.msra.mxu0 0.0
    %646 = vmatprep.subr.mxu0 0.0
    %647 = vmatpush1.msra.mxu0 0.0
    %648 = vmatprep.subr.mxu0 0.0
    %649 = vmatpush1.msra.mxu0 0.0
    %650 = vmatprep.subr.mxu0 0.0
    %651 = vmatpush1.msra.mxu0 0.0
    %652 = vmatprep.subr.mxu0 0.0
    %653 = vmatpush1.msra.mxu0 0.0
    %654 = vmatprep.subr.mxu0 0.0
    %655 = vmatpush1.msra.mxu0 0.0
    %656 = vmatprep.subr.mxu0 0.0
    %657 = vmatpush1.msra.mxu0 0.0
    %658 = vmatprep.subr.mxu0 0.0
    %v659 = vand.u32 %v27, 4294901760
    %v660 = vsub.f32 %v27, %v659
    %v661 = vand.u32 %v660, 4294901760
    %v662 = vsub.f32 %v660, %v661
    %v663 = vand.u32 %v662, 4294901760
    %664 = vmatpush1.msra.mxu0 %v663
    %665 = vmatprep.subr.mxu0 0.0
    %666 = vmatpush2.msra.mxu0 0.0
    %667 = vmatprep.subr.mxu0 0.0
    %668 = vmatpush2.msra.mxu0 0.0
    %669 = vmatprep.subr.mxu0 0.0
    %670 = vmatpush2.msra.mxu0 0.0
    %671 = vmatprep.subr.mxu0 0.0
    %672 = vmatpush2.msra.mxu0 0.0
    %673 = vmatprep.subr.mxu0 0.0
    %674 = vmatpush2.msra.mxu0 0.0
    %675 = vmatprep.subr.mxu0 0.0
    %676 = vmatpush2.msra.mxu0 0.0
    %677 = vmatprep.subr.mxu0 0.0
    %678 = vmatpush2.msra.mxu0 0.0
    %679 = vmatprep.subr.mxu0 0.0
    %680 = vmatpush2.msra.mxu0 0.0
    %681 = vmatprep.subr.mxu0 0.0
    %682 = vmatpush2.msra.mxu0 0.0
    %683 = vmatprep.subr.mxu0 0.0
    %684 = vmatpush2.msra.mxu0 0.0
    %685 = vmatprep.subr.mxu0 0.0
    %686 = vmatpush2.msra.mxu0 0.0
    %687 = vmatprep.subr.mxu0 0.0
    %688 = vmatpush2.msra.mxu0 0.0
    %689 = vmatprep.subr.mxu0 0.0
    %690 = vmatpush2.msra.mxu0 0.0
    %691 = vmatprep.subr.mxu0 0.0
    %692 = vmatpush2.msra.mxu0 0.0
    %693 = vmatprep.subr.mxu0 0.0
    %694 = vmatpush2.msra.mxu0 0.0
    %695 = vmatprep.subr.mxu0 0.0
    %696 = vmatpush2.msra.mxu0 0.0
    %697 = vmatprep.mubr.f32.mxu0 0.0
    %v698 = vand.u32 %v550, 4294901760
    %699 = vmatmul.mubr.f32.gmra.mxu0 %v698
    %v700 = vpop.f32.mrf.mxu0
    %v701 = vadd.f32 %v625, %v700
    %v702 = vpop.f32.mrf.mxu0
    %703 = vdwg.mxu0
    %704 = vmatprep.subr.mxu0 0.0
    %705 = vmatpush1.msra.mxu0 0.0
    %706 = vmatprep.subr.mxu0 0.0
    %707 = vmatpush1.msra.mxu0 0.0
    %708 = vmatprep.subr.mxu0 0.0
    %709 = vmatpush1.msra.mxu0 0.0
    %710 = vmatprep.subr.mxu0 0.0
    %711 = vmatpush1.msra.mxu0 0.0
    %712 = vmatprep.subr.mxu0 0.0
    %713 = vmatpush1.msra.mxu0 0.0
    %714 = vmatprep.subr.mxu0 0.0
    %715 = vmatpush1.msra.mxu0 0.0
    %716 = vmatprep.subr.mxu0 0.0
    %717 = vmatpush1.msra.mxu0 0.0
    %718 = vmatprep.subr.mxu0 0.0
    %719 = vmatpush1.msra.mxu0 0.0
    %720 = vmatprep.subr.mxu0 0.0
    %721 = vmatpush1.msra.mxu0 0.0
    %722 = vmatprep.subr.mxu0 0.0
    %723 = vmatpush1.msra.mxu0 0.0
    %724 = vmatprep.subr.mxu0 0.0
    %725 = vmatpush1.msra.mxu0 0.0
    %726 = vmatprep.subr.mxu0 0.0
    %727 = vmatpush1.msra.mxu0 0.0
    %728 = vmatprep.subr.mxu0 0.0
    %729 = vmatpush1.msra.mxu0 0.0
    %730 = vmatprep.subr.mxu0 0.0
    %731 = vmatpush1.msra.mxu0 0.0
    %732 = vmatprep.subr.mxu0 0.0
    %733 = vmatpush1.msra.mxu0 0.0
    %734 = vmatprep.subr.mxu0 0.0
    %v735 = vand.u32 %v27, 4294901760
    %v736 = vsub.f32 %v27, %v735
    %737 = vmatpush1.msra.mxu0 %v736
    %738 = vmatprep.subr.mxu0 0.0
    %739 = vmatpush2.msra.mxu0 0.0
    %740 = vmatprep.subr.mxu0 0.0
    %741 = vmatpush2.msra.mxu0 0.0
    %742 = vmatprep.subr.mxu0 0.0
    %743 = vmatpush2.msra.mxu0 0.0
    %744 = vmatprep.subr.mxu0 0.0
    %745 = vmatpush2.msra.mxu0 0.0
    %746 = vmatprep.subr.mxu0 0.0
    %747 = vmatpush2.msra.mxu0 0.0
    %748 = vmatprep.subr.mxu0 0.0
    %749 = vmatpush2.msra.mxu0 0.0
    %750 = vmatprep.subr.mxu0 0.0
    %751 = vmatpush2.msra.mxu0 0.0
    %752 = vmatprep.subr.mxu0 0.0
    %753 = vmatpush2.msra.mxu0 0.0
    %754 = vmatprep.subr.mxu0 0.0
    %755 = vmatpush2.msra.mxu0 0.0
    %756 = vmatprep.subr.mxu0 0.0
    %757 = vmatpush2.msra.mxu0 0.0
    %758 = vmatprep.subr.mxu0 0.0
    %759 = vmatpush2.msra.mxu0 0.0
    %760 = vmatprep.subr.mxu0 0.0
    %761 = vmatpush2.msra.mxu0 0.0
    %762 = vmatprep.subr.mxu0 0.0
    %763 = vmatpush2.msra.mxu0 0.0
    %764 = vmatprep.subr.mxu0 0.0
    %765 = vmatpush2.msra.mxu0 0.0
    %766 = vmatprep.subr.mxu0 0.0
    %767 = vmatpush2.msra.mxu0 0.0
    %768 = vmatprep.subr.mxu0 0.0
    %769 = vmatpush2.msra.mxu0 0.0
    %770 = vmatprep.mubr.f32.mxu0 0.0
    %v771 = vand.u32 %v550, 4294901760
    %v772 = vsub.f32 %v550, %v771
    %773 = vmatmul.mubr.f32.gmra.mxu0 %v772
    %v774 = vpop.f32.mrf.mxu0
    %v775 = vadd.f32 %v701, %v774
    %v776 = vpop.f32.mrf.mxu0
    %777 = vdwg.mxu0
    %778 = vmatprep.subr.mxu0 0.0
    %779 = vmatpush1.msra.mxu0 0.0
    %780 = vmatprep.subr.mxu0 0.0
    %781 = vmatpush1.msra.mxu0 0.0
    %782 = vmatprep.subr.mxu0 0.0
    %783 = vmatpush1.msra.mxu0 0.0
    %784 = vmatprep.subr.mxu0 0.0
    %785 = vmatpush1.msra.mxu0 0.0
    %786 = vmatprep.subr.mxu0 0.0
    %787 = vmatpush1.msra.mxu0 0.0
    %788 = vmatprep.subr.mxu0 0.0
    %789 = vmatpush1.msra.mxu0 0.0
    %790 = vmatprep.subr.mxu0 0.0
    %791 = vmatpush1.msra.mxu0 0.0
    %792 = vmatprep.subr.mxu0 0.0
    %793 = vmatpush1.msra.mxu0 0.0
    %794 = vmatprep.subr.mxu0 0.0
    %795 = vmatpush1.msra.mxu0 0.0
    %796 = vmatprep.subr.mxu0 0.0
    %797 = vmatpush1.msra.mxu0 0.0
    %798 = vmatprep.subr.mxu0 0.0
    %799 = vmatpush1.msra.mxu0 0.0
    %800 = vmatprep.subr.mxu0 0.0
    %801 = vmatpush1.msra.mxu0 0.0
    %802 = vmatprep.subr.mxu0 0.0
    %803 = vmatpush1.msra.mxu0 0.0
    %804 = vmatprep.subr.mxu0 0.0
    %805 = vmatpush1.msra.mxu0 0.0
    %806 = vmatprep.subr.mxu0 0.0
    %807 = vmatpush1.msra.mxu0 0.0
    %808 = vmatprep.subr.mxu0 0.0
    %v809 = vand.u32 %v27, 4294901760
    %810 = vmatpush1.msra.mxu0 %v809
    %811 = vmatprep.subr.mxu0 0.0
    %812 = vmatpush2.msra.mxu0 0.0
    %813 = vmatprep.subr.mxu0 0.0
    %814 = vmatpush2.msra.mxu0 0.0
    %815 = vmatprep.subr.mxu0 0.0
    %816 = vmatpush2.msra.mxu0 0.0
    %817 = vmatprep.subr.mxu0 0.0
    %818 = vmatpush2.msra.mxu0 0.0
    %819 = vmatprep.subr.mxu0 0.0
    %820 = vmatpush2.msra.mxu0 0.0
    %821 = vmatprep.subr.mxu0 0.0
    %822 = vmatpush2.msra.mxu0 0.0
    %823 = vmatprep.subr.mxu0 0.0
    %824 = vmatpush2.msra.mxu0 0.0
    %825 = vmatprep.subr.mxu0 0.0
    %826 = vmatpush2.msra.mxu0 0.0
    %827 = vmatprep.subr.mxu0 0.0
    %828 = vmatpush2.msra.mxu0 0.0
    %829 = vmatprep.subr.mxu0 0.0
    %830 = vmatpush2.msra.mxu0 0.0
    %831 = vmatprep.subr.mxu0 0.0
    %832 = vmatpush2.msra.mxu0 0.0
    %833 = vmatprep.subr.mxu0 0.0
    %834 = vmatpush2.msra.mxu0 0.0
    %835 = vmatprep.subr.mxu0 0.0
    %836 = vmatpush2.msra.mxu0 0.0
    %837 = vmatprep.subr.mxu0 0.0
    %838 = vmatpush2.msra.mxu0 0.0
    %839 = vmatprep.subr.mxu0 0.0
    %840 = vmatpush2.msra.mxu0 0.0
    %841 = vmatprep.subr.mxu0 0.0
    %842 = vmatpush2.msra.mxu0 0.0
    %843 = vmatprep.mubr.f32.mxu0 0.0
    %v844 = vand.u32 %v550, 4294901760
    %v845 = vsub.f32 %v550, %v844
    %v846 = vand.u32 %v845, 4294901760
    %847 = vmatmul.mubr.f32.gmra.mxu0 %v846
    %v848 = vpop.f32.mrf.mxu0
    %v849 = vadd.f32 %v775, %v848
    %v850 = vpop.f32.mrf.mxu0
    %851 = vdwg.mxu0
    %852 = vmatprep.subr.mxu0 0.0
    %853 = vmatpush1.msra.mxu0 0.0
    %854 = vmatprep.subr.mxu0 0.0
    %855 = vmatpush1.msra.mxu0 0.0
    %856 = vmatprep.subr.mxu0 0.0
    %857 = vmatpush1.msra.mxu0 0.0
    %858 = vmatprep.subr.mxu0 0.0
    %859 = vmatpush1.msra.mxu0 0.0
    %860 = vmatprep.subr.mxu0 0.0
    %861 = vmatpush1.msra.mxu0 0.0
    %862 = vmatprep.subr.mxu0 0.0
    %863 = vmatpush1.msra.mxu0 0.0
    %864 = vmatprep.subr.mxu0 0.0
    %865 = vmatpush1.msra.mxu0 0.0
    %866 = vmatprep.subr.mxu0 0.0
    %867 = vmatpush1.msra.mxu0 0.0
    %868 = vmatprep.subr.mxu0 0.0
    %869 = vmatpush1.msra.mxu0 0.0
    %870 = vmatprep.subr.mxu0 0.0
    %871 = vmatpush1.msra.mxu0 0.0
    %872 = vmatprep.subr.mxu0 0.0
    %873 = vmatpush1.msra.mxu0 0.0
    %874 = vmatprep.subr.mxu0 0.0
    %875 = vmatpush1.msra.mxu0 0.0
    %876 = vmatprep.subr.mxu0 0.0
    %877 = vmatpush1.msra.mxu0 0.0
    %878 = vmatprep.subr.mxu0 0.0
    %879 = vmatpush1.msra.mxu0 0.0
    %880 = vmatprep.subr.mxu0 0.0
    %881 = vmatpush1.msra.mxu0 0.0
    %882 = vmatprep.subr.mxu0 0.0
    %v883 = vand.u32 %v27, 4294901760
    %v884 = vsub.f32 %v27, %v883
    %v885 = vand.u32 %v884, 4294901760
    %886 = vmatpush1.msra.mxu0 %v885
    %887 = vmatprep.subr.mxu0 0.0
    %888 = vmatpush2.msra.mxu0 0.0
    %889 = vmatprep.subr.mxu0 0.0
    %890 = vmatpush2.msra.mxu0 0.0
    %891 = vmatprep.subr.mxu0 0.0
    %892 = vmatpush2.msra.mxu0 0.0
    %893 = vmatprep.subr.mxu0 0.0
    %894 = vmatpush2.msra.mxu0 0.0
    %895 = vmatprep.subr.mxu0 0.0
    %896 = vmatpush2.msra.mxu0 0.0
    %897 = vmatprep.subr.mxu0 0.0
    %898 = vmatpush2.msra.mxu0 0.0
    %899 = vmatprep.subr.mxu0 0.0
    %900 = vmatpush2.msra.mxu0 0.0
    %901 = vmatprep.subr.mxu0 0.0
    %902 = vmatpush2.msra.mxu0 0.0
    %903 = vmatprep.subr.mxu0 0.0
    %904 = vmatpush2.msra.mxu0 0.0
    %905 = vmatprep.subr.mxu0 0.0
    %906 = vmatpush2.msra.mxu0 0.0
    %907 = vmatprep.subr.mxu0 0.0
    %908 = vmatpush2.msra.mxu0 0.0
    %909 = vmatprep.subr.mxu0 0.0
    %910 = vmatpush2.msra.mxu0 0.0
    %911 = vmatprep.subr.mxu0 0.0
    %912 = vmatpush2.msra.mxu0 0.0
    %913 = vmatprep.subr.mxu0 0.0
    %914 = vmatpush2.msra.mxu0 0.0
    %915 = vmatprep.subr.mxu0 0.0
    %916 = vmatpush2.msra.mxu0 0.0
    %917 = vmatprep.subr.mxu0 0.0
    %918 = vmatpush2.msra.mxu0 0.0
    %919 = vmatprep.mubr.f32.mxu0 0.0
    %v920 = vand.u32 %v550, 4294901760
    %921 = vmatmul.mubr.f32.gmra.mxu0 %v920
    %v922 = vpop.f32.mrf.mxu0
    %v923 = vadd.f32 %v849, %v922
    %v924 = vpop.f32.mrf.mxu0
    %925 = vdwg.mxu0
    %926 = vmatprep.subr.mxu0 0.0
    %927 = vmatpush1.msra.mxu0 0.0
    %928 = vmatprep.subr.mxu0 0.0
    %929 = vmatpush1.msra.mxu0 0.0
    %930 = vmatprep.subr.mxu0 0.0
    %931 = vmatpush1.msra.mxu0 0.0
    %932 = vmatprep.subr.mxu0 0.0
    %933 = vmatpush1.msra.mxu0 0.0
    %934 = vmatprep.subr.mxu0 0.0
    %935 = vmatpush1.msra.mxu0 0.0
    %936 = vmatprep.subr.mxu0 0.0
    %937 = vmatpush1.msra.mxu0 0.0
    %938 = vmatprep.subr.mxu0 0.0
    %939 = vmatpush1.msra.mxu0 0.0
    %940 = vmatprep.subr.mxu0 0.0
    %941 = vmatpush1.msra.mxu0 0.0
    %942 = vmatprep.subr.mxu0 0.0
    %943 = vmatpush1.msra.mxu0 0.0
    %944 = vmatprep.subr.mxu0 0.0
    %945 = vmatpush1.msra.mxu0 0.0
    %946 = vmatprep.subr.mxu0 0.0
    %947 = vmatpush1.msra.mxu0 0.0
    %948 = vmatprep.subr.mxu0 0.0
    %949 = vmatpush1.msra.mxu0 0.0
    %950 = vmatprep.subr.mxu0 0.0
    %951 = vmatpush1.msra.mxu0 0.0
    %952 = vmatprep.subr.mxu0 0.0
    %953 = vmatpush1.msra.mxu0 0.0
    %954 = vmatprep.subr.mxu0 0.0
    %955 = vmatpush1.msra.mxu0 0.0
    %956 = vmatprep.subr.mxu0 0.0
    %v957 = vand.u32 %v27, 4294901760
    %958 = vmatpush1.msra.mxu0 %v957
    %959 = vmatprep.subr.mxu0 0.0
    %960 = vmatpush2.msra.mxu0 0.0
    %961 = vmatprep.subr.mxu0 0.0
    %962 = vmatpush2.msra.mxu0 0.0
    %963 = vmatprep.subr.mxu0 0.0
    %964 = vmatpush2.msra.mxu0 0.0
    %965 = vmatprep.subr.mxu0 0.0
    %966 = vmatpush2.msra.mxu0 0.0
    %967 = vmatprep.subr.mxu0 0.0
    %968 = vmatpush2.msra.mxu0 0.0
    %969 = vmatprep.subr.mxu0 0.0
    %970 = vmatpush2.msra.mxu0 0.0
    %971 = vmatprep.subr.mxu0 0.0
    %972 = vmatpush2.msra.mxu0 0.0
    %973 = vmatprep.subr.mxu0 0.0
    %974 = vmatpush2.msra.mxu0 0.0
    %975 = vmatprep.subr.mxu0 0.0
    %976 = vmatpush2.msra.mxu0 0.0
    %977 = vmatprep.subr.mxu0 0.0
    %978 = vmatpush2.msra.mxu0 0.0
    %979 = vmatprep.subr.mxu0 0.0
    %980 = vmatpush2.msra.mxu0 0.0
    %981 = vmatprep.subr.mxu0 0.0
    %982 = vmatpush2.msra.mxu0 0.0
    %983 = vmatprep.subr.mxu0 0.0
    %984 = vmatpush2.msra.mxu0 0.0
    %985 = vmatprep.subr.mxu0 0.0
    %986 = vmatpush2.msra.mxu0 0.0
    %987 = vmatprep.subr.mxu0 0.0
    %988 = vmatpush2.msra.mxu0 0.0
    %989 = vmatprep.subr.mxu0 0.0
    %990 = vmatpush2.msra.mxu0 0.0
    %991 = vmatprep.mubr.f32.mxu0 0.0
    %v992 = vand.u32 %v550, 4294901760
    %993 = vmatmul.mubr.f32.gmra.mxu0 %v992
    %v994 = vpop.f32.mrf.mxu0
    %v995 = vadd.f32 %v923, %v994
    %v996 = vpop.f32.mrf.mxu0
    %997 = vdwg.mxu0
    %v998 = vrcp.pop %v100
    %v1000 = vrot.slane %v998, 1
    %v1003 = vmul.f32 %v547, %v998
    %v1004 = vmul.f32 %v995, %v1000
    %v1007 = vrot.slane %v1004, 7
    %v1008 = vsel %vm56, %v1007, %v1003
    %vm1010 = vcmask 254976
    %1011 = vst.msk [vmem:[#allocation5] sm:$0x3] %vm1010, %v1008
    // Predicated region
    $region14: #{tpu_custom_call.1} parent=1 // pred_check
      _
    $region15: #{tpu_custom_call.1} parent=1 // pred_check_branch
      %1013 = sbr.rel (0) target = $region17
    $region16: #{tpu_custom_call.1} parent=1 // pred_region
      %s1015 = ssub.s32 32, 32
      %1016 = vsyncadd [#allocation4], %s1015
      %s1018 = sshll.u32 [#allocation5], 4
      %s1019 = int_to_ptr.vmem [resolvable:$true] %s1018
      %1021 = dma.vmem_to_hbm [thread:$0]  %s1019, 32, %s2, [#allocation4]
    $region17: #{tpu_custom_call.1} parent=1 // pred_fallthru
      _
    // Predicated region
    $region18: #{tpu_custom_call.1} parent=1 // pred_check
      _
    $region19: #{tpu_custom_call.1} parent=1 // pred_check_branch
      %1023 = sbr.rel (0) target = $region21
    $region20: #{tpu_custom_call.1} parent=1 // pred_region
      %1024 = dma.done [#allocation4], 32
    $region21: #{tpu_custom_call.1} parent=1 // pred_fallthru
      _
    %1025 = vsyncpa [#allocation3], 1
    %1026 = vsyncpa [#allocation4], 1

</llo_original>
